<compile_context>
chip_gen: v6e
topology: v6e:2x2x1
jax: 0.10.0
libtpu: 0.0.40
codegen_flags: <defaults>
</compile_context>

<pallas_src>
import functools
import math

import jax
import jax.numpy as jnp
from jax.experimental import pallas as pl
from jax.experimental.pallas import tpu as pltpu

LANE = 128  # lane width: each head's output slab is padded to a multiple of this


def _round_up(v, m):
    return ((v + m - 1) // m) * m


def _head_meta(output_size_list):
    # (true_m, padded_slab_width); the value lane lives at column mp-1 (>= m).
    return tuple((int(m), _round_up(int(m) + 1, LANE)) for m in output_size_list)


# ---------------------------------------------------------------------------
# fused kernel: all heads, both streams, one batch tile per grid step
# ---------------------------------------------------------------------------
def _fused_multi_head_kernel(x_ref, w1_ref, b1_ref, w2_ref, b2_ref, out_ref,
                             *, head_meta):
    x = x_ref[...]                                                  # (TB, H)

    # layer 1 (both streams, all heads): one wide matmul + one ReLU
    h = jnp.dot(x, w1_ref[...], preferred_element_type=jnp.float32)
    h = jnp.maximum(h + b1_ref[...], 0.0)                           # f32 elementwise
    h = h.astype(w2_ref.dtype)                                      # matmul dtype

    # layer 2: block-diagonal packed weights -> per-head slab of
    #   cols [0, m)      : advantage values
    #   cols [m, mp-1)   : exact zeros (zero-padded Wa2/ba2)
    #   col  mp-1        : value stream v
    z = jnp.dot(h, w2_ref[...], preferred_element_type=jnp.float32) + b2_ref[...]

    outs = []
    off = 0
    for m, mp in head_meta:
        slab = z[:, off:off + mp]                                   # (TB, mp), lane-aligned
        v = slab[:, mp - 1:mp]                                      # (TB, 1)
        a_sum = jnp.sum(slab, axis=-1, keepdims=True) - v           # padded cols are 0
        outs.append(slab - a_sum * (1.0 / m) + v)                   # cols >= m are garbage,
        off += mp                                                   # sliced off by wrapper
    out_ref[...] = jnp.concatenate(outs, axis=-1).astype(out_ref.dtype)


def _pick_tb(batch, max_tb=512):
    """Largest batch tile that is a divisor of B and a multiple of 8 (f32 sublane)."""
    if batch <= max_tb:
        return batch                      # single block: full-dim block is always legal
    start = max_tb - (max_tb % 8)
    for tb in range(start, 7, -8):
        if batch % tb == 0:
            return tb
    return batch                          # fallback: one big block


def multi_head_forward(x, packed_params, head_meta, *, tb=None):
    """MultiHead.forward: dict with 'logit' -> list of (B, Mi) tensors."""
    w1, b1, w2, b2 = packed_params
    B, H = x.shape
    n_out = w2.shape[1]

    TB = tb if tb is not None else _pick_tb(B)
    assert B % TB == 0, (B, TB)
    grid = (B // TB,)

    # VMEM budget: resident weights + double-buffered x / out tiles, with headroom.
    w_bytes = sum(int(a.size) * a.dtype.itemsize for a in (w1, b1, w2, b2))
    tile_bytes = TB * H * jnp.dtype(w1.dtype).itemsize + TB * n_out * 4
    vmem_limit = int(min(max(2 * (w_bytes + tile_bytes) + (2 << 20), 4 << 20),
                         64 << 20))

    padded = pl.pallas_call(
        functools.partial(_fused_multi_head_kernel, head_meta=head_meta),
        out_shape=jax.ShapeDtypeStruct((B, n_out), jnp.float32),
        grid=grid,
        in_specs=[
            pl.BlockSpec((TB, H), lambda i: (i, 0)),          # x: batch-tiled
            pl.BlockSpec(w1.shape, lambda i: (0, 0)),         # weights: resident
            pl.BlockSpec(b1.shape, lambda i: (0, 0)),
            pl.BlockSpec(w2.shape, lambda i: (0, 0)),
            pl.BlockSpec(b2.shape, lambda i: (0, 0)),
        ],
        out_specs=pl.BlockSpec((TB, n_out), lambda i: (i, 0)),
        compiler_params=pltpu.CompilerParams(
            dimension_semantics=("parallel",),
            vmem_limit_bytes=vmem_limit,
        ),
    )(x.astype(w1.dtype), w1, b1, w2, b2)

    # slice each head's true M columns back out (list -> {'logit': [...]})
    logits = []
    off = 0
    for m, mp in head_meta:
        logits.append(padded[:, off:off + m])
        off += mp
    return {"logit": logits}


# ---------------------------------------------------------------------------
# parameter init (PyTorch nn.Linear style) + one-time packing/fusion
# ---------------------------------------------------------------------------
def _linear_params(key, fan_in, fan_out):
    bound = 1.0 / math.sqrt(fan_in)
    kw, kb = jax.random.split(key)
    w = jax.random.uniform(kw, (fan_in, fan_out), jnp.float32, -bound, bound)
    b = jax.random.uniform(kb, (1, fan_out), jnp.float32, -bound, bound)
    return w, b


def init_multi_head(key, hidden_size, output_size_list):
    """Raw per-head DuelingHead params (same structure as the PyTorch module)."""
    params = []
    for m in output_size_list:
        key, k1, k2, k3, k4 = jax.random.split(key, 5)
        wa1, ba1 = _linear_params(k1, hidden_size, hidden_size)   # A-stream MLP
        wa2, ba2 = _linear_params(k2, hidden_size, m)             # A-stream out
        wv1, bv1 = _linear_params(k3, hidden_size, hidden_size)   # V-stream MLP
        wv2, bv2 = _linear_params(k4, hidden_size, 1)             # V-stream out
        params.append((wa1, ba1, wa2, ba2, wv1, bv1, wv2, bv2))
    return params


def pack_multi_head_params(head_params, output_size_list, param_dtype=jnp.float32):
    """One-time fusion of all heads/streams into two wide matmul weights.

    W1 : (H, n_heads*2H)      [per head: Wa1 | Wv1]
    W2 : (n_heads*2H, n_out)  block-diagonal; per head block:
           rows [0,H)  x cols [0,m)     = Wa2
           rows [H,2H) x col  mp-1      = Wv2      (value lane, >= m)
    Biases stay f32 (added after the f32-accumulated matmul).
    """
    meta = _head_meta(output_size_list)
    H = head_params[0][0].shape[0]
    n_hidden = len(head_params) * 2 * H
    n_out = sum(mp for _, mp in meta)

    w1 = jnp.zeros((H, n_hidden), jnp.float32)
    b1 = jnp.zeros((1, n_hidden), jnp.float32)
    w2 = jnp.zeros((n_hidden, n_out), jnp.float32)
    b2 = jnp.zeros((1, n_out), jnp.float32)

    col = 0
    for h, ((wa1, ba1, wa2, ba2, wv1, bv1, wv2, bv2), (m, mp)) in enumerate(
            zip(head_params, meta)):
        r = h * 2 * H
        w1 = w1.at[:, r:r + H].set(wa1)
        w1 = w1.at[:, r + H:r + 2 * H].set(wv1)
        b1 = b1.at[:, r:r + H].set(ba1)
        b1 = b1.at[:, r + H:r + 2 * H].set(bv1)
        w2 = w2.at[r:r + H, col:col + m].set(wa2)
        w2 = w2.at[r + H:r + 2 * H, col + mp - 1:col + mp].set(wv2)
        b2 = b2.at[:, col:col + m].set(ba2)
        b2 = b2.at[:, col + mp - 1:col + mp].set(bv2)
        col += mp

    return (w1.astype(param_dtype), b1, w2.astype(param_dtype), b2), meta


def _reference_forward(x, head_params, output_size_list):
    """Plain-JAX reference (unfused, per head) for sanity checking."""
    outs = []
    for (wa1, ba1, wa2, ba2, wv1, bv1, wv2, bv2), m in zip(head_params,
                                                           output_size_list):
        a = jnp.maximum(x @ wa1 + ba1, 0.0) @ wa2 + ba2
        v = jnp.maximum(x @ wv1 + bv1, 0.0) @ wv2 + bv2
        outs.append(a - jnp.mean(a, axis=-1, keepdims=True) + v)
    return outs


if __name__ == "__main__":
    H = 32
    output_size_list = [2, 3, 5]

    key = jax.random.PRNGKey(0)
    kx, kp, kx2 = jax.random.split(key, 3)
    head_params = init_multi_head(kp, H, output_size_list)
    # f32 params here so the check vs the reference stays tight; pass
    # param_dtype=jnp.bfloat16 for the v6e/v7x MXU-throughput configuration.
    packed, meta = pack_multi_head_params(head_params, output_size_list,
                                          param_dtype=jnp.float32)

    # --- small batch, single block (grid = 1) ---------------------------------
    B = 4
    x = jax.random.normal(kx, (B, H), jnp.float32)
    out = multi_head_forward(x, packed, meta)
    out = jax.block_until_ready(out)

    ref = _reference_forward(x, head_params, output_size_list)
    assert isinstance(out, dict) and "logit" in out
    for i, m in enumerate(output_size_list):
        assert out["logit"][i].shape == (B, m), out["logit"][i].shape
        assert jnp.allclose(out["logit"][i], ref[i], atol=1e-3, rtol=1e-3), \
            f"mismatch head {i}"

    # --- larger batch exercising the batch grid / pipelining path -------------
    B2 = 64
    x2 = jax.random.normal(kx2, (B2, H), jnp.float32)
    out2 = multi_head_forward(x2, packed, meta, tb=8)   # grid = (8,)
    out2 = jax.block_until_ready(out2)
    ref2 = _reference_forward(x2, head_params, output_size_list)
    for i, m in enumerate(output_size_list):
        assert out2["logit"][i].shape == (B2, m)
        assert jnp.allclose(out2["logit"][i], ref2[i], atol=1e-3, rtol=1e-3), \
            f"mismatch head {i} (tiled batch)"

    print("KERNEL_OK")
</pallas_src>

<mosaic_0001>
module attributes {stable_mosaic.version = 11 : i64} {
  func.func @_fused_multi_head_kernel(%arg0: i32, %arg1: memref<4x32xf32, #tpu.memory_space<vmem>>, %arg2: memref<32x192xf32, #tpu.memory_space<vmem>>, %arg3: memref<1x192xf32, #tpu.memory_space<vmem>>, %arg4: memref<192x384xf32, #tpu.memory_space<vmem>>, %arg5: memref<1x384xf32, #tpu.memory_space<vmem>>, %arg6: memref<4x384xf32, #tpu.memory_space<vmem>>) attributes {dimension_semantics = [#tpu.dimension_semantics<parallel>], iteration_bounds = array<i64: 1>, scalar_prefetch = 0 : i64, scratch_operands = 0 : i64, tpu.core_type = #tpu.core_type<tc>, window_params = [{transform_indices = @transform_0, window_bounds = array<i64: 4, 32>}, {pipeline_mode = #tpu.pipeline_mode<synchronous>, transform_indices = @transform_1, window_bounds = array<i64: 32, 192>}, {pipeline_mode = #tpu.pipeline_mode<synchronous>, transform_indices = @transform_2, window_bounds = array<i64: 1, 192>}, {pipeline_mode = #tpu.pipeline_mode<synchronous>, transform_indices = @transform_3, window_bounds = array<i64: 192, 384>}, {pipeline_mode = #tpu.pipeline_mode<synchronous>, transform_indices = @transform_4, window_bounds = array<i64: 1, 384>}, {transform_indices = @transform_5, window_bounds = array<i64: 4, 384>}]} {
    %c0 = arith.constant 0 : index
    %c0_0 = arith.constant 0 : index
    %0 = vector.load %arg1[%c0, %c0_0] : memref<4x32xf32, #tpu.memory_space<vmem>>, vector<4x32xf32>
    %c0_1 = arith.constant 0 : index
    %c0_2 = arith.constant 0 : index
    %1 = vector.load %arg2[%c0_1, %c0_2] : memref<32x192xf32, #tpu.memory_space<vmem>>, vector<32x192xf32>
    %cst = arith.constant dense<0.000000e+00> : vector<4x192xf32>
    %2 = tpu.matmul %0, %1, %cst {dimension_numbers = #tpu.dot_dimension_numbers<[1], [0], [0], [1], [0, 0, 1, 1], [], []>} : vector<4x32xf32>, vector<32x192xf32>, vector<4x192xf32> -> vector<4x192xf32>
    %c0_3 = arith.constant 0 : index
    %c0_4 = arith.constant 0 : index
    %3 = vector.load %arg3[%c0_3, %c0_4] : memref<1x192xf32, #tpu.memory_space<vmem>>, vector<1x192xf32>
    %4 = vector.broadcast %3 : vector<1x192xf32> to vector<4x192xf32>
    %5 = arith.addf %2, %4 : vector<4x192xf32>
    %cst_5 = arith.constant 0.000000e+00 : f32
    %6 = vector.broadcast %cst_5 : f32 to vector<4x192xf32>
    %7 = arith.maximumf %5, %6 : vector<4x192xf32>
    %c0_6 = arith.constant 0 : index
    %c0_7 = arith.constant 0 : index
    %8 = vector.load %arg4[%c0_6, %c0_7] : memref<192x384xf32, #tpu.memory_space<vmem>>, vector<192x384xf32>
    %cst_8 = arith.constant dense<0.000000e+00> : vector<4x384xf32>
    %9 = tpu.matmul %7, %8, %cst_8 {dimension_numbers = #tpu.dot_dimension_numbers<[1], [0], [0], [1], [0, 0, 1, 1], [], []>} : vector<4x192xf32>, vector<192x384xf32>, vector<4x384xf32> -> vector<4x384xf32>
    %c0_9 = arith.constant 0 : index
    %c0_10 = arith.constant 0 : index
    %10 = vector.load %arg5[%c0_9, %c0_10] : memref<1x384xf32, #tpu.memory_space<vmem>>, vector<1x384xf32>
    %11 = vector.broadcast %10 : vector<1x384xf32> to vector<4x384xf32>
    %12 = arith.addf %9, %11 : vector<4x384xf32>
    %13 = vector.extract_strided_slice %12 {offsets = [0, 0], sizes = [4, 128], strides = [1, 1]} : vector<4x384xf32> to vector<4x128xf32>
    %14 = vector.extract_strided_slice %13 {offsets = [0, 127], sizes = [4, 1], strides = [1, 1]} : vector<4x128xf32> to vector<4x1xf32>
    %cst_11 = arith.constant dense<0.000000e+00> : vector<4xf32>
    %15 = vector.multi_reduction <add>, %13, %cst_11 [1] : vector<4x128xf32> to vector<4xf32>
    %16 = vector.shape_cast %15 : vector<4xf32> to vector<4x1xf32>
    %17 = arith.subf %16, %14 : vector<4x1xf32>
    %cst_12 = arith.constant 5.000000e-01 : f32
    %18 = vector.broadcast %cst_12 : f32 to vector<4x1xf32>
    %19 = arith.mulf %17, %18 : vector<4x1xf32>
    %20 = vector.broadcast %19 : vector<4x1xf32> to vector<4x128xf32>
    %21 = arith.subf %13, %20 : vector<4x128xf32>
    %22 = vector.broadcast %14 : vector<4x1xf32> to vector<4x128xf32>
    %23 = arith.addf %21, %22 : vector<4x128xf32>
    %24 = vector.extract_strided_slice %12 {offsets = [0, 128], sizes = [4, 128], strides = [1, 1]} : vector<4x384xf32> to vector<4x128xf32>
    %25 = vector.extract_strided_slice %24 {offsets = [0, 127], sizes = [4, 1], strides = [1, 1]} : vector<4x128xf32> to vector<4x1xf32>
    %cst_13 = arith.constant dense<0.000000e+00> : vector<4xf32>
    %26 = vector.multi_reduction <add>, %24, %cst_13 [1] : vector<4x128xf32> to vector<4xf32>
    %27 = vector.shape_cast %26 : vector<4xf32> to vector<4x1xf32>
    %28 = arith.subf %27, %25 : vector<4x1xf32>
    %cst_14 = arith.constant 0.333333343 : f32
    %29 = vector.broadcast %cst_14 : f32 to vector<4x1xf32>
    %30 = arith.mulf %28, %29 : vector<4x1xf32>
    %31 = vector.broadcast %30 : vector<4x1xf32> to vector<4x128xf32>
    %32 = arith.subf %24, %31 : vector<4x128xf32>
    %33 = vector.broadcast %25 : vector<4x1xf32> to vector<4x128xf32>
    %34 = arith.addf %32, %33 : vector<4x128xf32>
    %35 = vector.extract_strided_slice %12 {offsets = [0, 256], sizes = [4, 128], strides = [1, 1]} : vector<4x384xf32> to vector<4x128xf32>
    %36 = vector.extract_strided_slice %35 {offsets = [0, 127], sizes = [4, 1], strides = [1, 1]} : vector<4x128xf32> to vector<4x1xf32>
    %cst_15 = arith.constant dense<0.000000e+00> : vector<4xf32>
    %37 = vector.multi_reduction <add>, %35, %cst_15 [1] : vector<4x128xf32> to vector<4xf32>
    %38 = vector.shape_cast %37 : vector<4xf32> to vector<4x1xf32>
    %39 = arith.subf %38, %36 : vector<4x1xf32>
    %cst_16 = arith.constant 2.000000e-01 : f32
    %40 = vector.broadcast %cst_16 : f32 to vector<4x1xf32>
    %41 = arith.mulf %39, %40 : vector<4x1xf32>
    %42 = vector.broadcast %41 : vector<4x1xf32> to vector<4x128xf32>
    %43 = arith.subf %35, %42 : vector<4x128xf32>
    %44 = vector.broadcast %36 : vector<4x1xf32> to vector<4x128xf32>
    %45 = arith.addf %43, %44 : vector<4x128xf32>
    %46 = tpu.concatenate %23, %34, %45 in 1 : vector<4x128xf32>, vector<4x128xf32>, vector<4x128xf32> -> vector<4x384xf32>
    %c0_17 = arith.constant 0 : index
    %c0_18 = arith.constant 0 : index
    %47 = vector.load %arg6[%c0_17, %c0_18] : memref<4x384xf32, #tpu.memory_space<vmem>>, vector<4x384xf32>
    tpu.vector_store %arg6[%c0_17, %c0_18], %46 {strides = array<i32>} : memref<4x384xf32, #tpu.memory_space<vmem>>, vector<4x384xf32>,
    return
  }
  func.func @transform_0(%arg0: i32) -> (i32, i32) {
    %c0_i32 = arith.constant 0 : i32
    %c0_i32_0 = arith.constant 0 : i32
    return %arg0, %c0_i32 : i32, i32
  }
  func.func @transform_1(%arg0: i32) -> (i32, i32) {
    %c0_i32 = arith.constant 0 : i32
    %c0_i32_0 = arith.constant 0 : i32
    %c0_i32_1 = arith.constant 0 : i32
    return %c0_i32, %c0_i32_0 : i32, i32
  }
  func.func @transform_2(%arg0: i32) -> (i32, i32) {
    %c0_i32 = arith.constant 0 : i32
    %c0_i32_0 = arith.constant 0 : i32
    %c0_i32_1 = arith.constant 0 : i32
    return %c0_i32, %c0_i32_0 : i32, i32
  }
  func.func @transform_3(%arg0: i32) -> (i32, i32) {
    %c0_i32 = arith.constant 0 : i32
    %c0_i32_0 = arith.constant 0 : i32
    %c0_i32_1 = arith.constant 0 : i32
    return %c0_i32, %c0_i32_0 : i32, i32
  }
  func.func @transform_4(%arg0: i32) -> (i32, i32) {
    %c0_i32 = arith.constant 0 : i32
    %c0_i32_0 = arith.constant 0 : i32
    %c0_i32_1 = arith.constant 0 : i32
    return %c0_i32, %c0_i32_0 : i32, i32
  }
  func.func @transform_5(%arg0: i32) -> (i32, i32) {
    %c0_i32 = arith.constant 0 : i32
    %c0_i32_0 = arith.constant 0 : i32
    return %arg0, %c0_i32 : i32, i32
  }
}

</mosaic_0001>

<llo_original>
// kernel: tpu_custom_call.1
$region0: #{tpu_custom_call.1}
  #allocation0 [shape = 'u32[]', space=smem, size = 0x4, offset = 0x4, fixed_abs, tag = 'smem constant byte address 0x4 - core index']
  #allocation1 [shape = 'u32[144,128]{1,0:T(1,128)}', space=vmem, size = 0x12000, scoped, tag = 'internal scratch']
  %s0 = inlined_call_operand.hbm [shape: f32[4,32], index: 0, kind: input, shape index: {}]
  %s1 = inlined_call_operand.hbm [shape: f32[32,192], index: 1, kind: input, shape index: {}]
  %s2 = inlined_call_operand.vmem [shape: f32[1,192], index: 2, kind: input, shape index: {}]
  %s3 = inlined_call_operand.hbm [shape: f32[192,384], index: 3, kind: input, shape index: {}]
  %s4 = inlined_call_operand.vmem [shape: f32[1,384], index: 4, kind: input, shape index: {}]
  %s5 = inlined_call_operand.hbm [shape: f32[4,384], index: 5, kind: output, shape index: {}]
  %s6 = sld [smem:[#allocation0]]
  $region42: #{tpu_custom_call.1} parent=0
    _
  %s8 = ssub.s32 1, %s6
  %s9 = scalar_select 0, %s8, %s6
  $region1: #{tpu_custom_call.1} parent=0
    #allocation2 [shape = 'u8[2048]{0}', space=vmem, size = 0x800, scoped, tag = 'input window, operand 0, single buffered']
    #allocation3 [shape = 's32[1]{0}', space=sflag, size = 0x4, scoped, tag = 'scoped memory for tpu_custom_call.1']
    #allocation4 [shape = 's32[1]{0}', space=sflag, size = 0x4, scoped, tag = 'scoped memory for tpu_custom_call.1']
    #allocation5 [shape = 'u8[32768]{0}', space=vmem, size = 0x8000, scoped, tag = 'input window, operand 1, single buffered']
    #allocation6 [shape = 's32[1]{0}', space=sflag, size = 0x4, scoped, tag = 'scoped memory for tpu_custom_call.1']
    #allocation7 [shape = 'u8[294912]{0}', space=vmem, size = 0x48000, scoped, tag = 'input window, operand 3, single buffered']
    #allocation8 [shape = 'u8[6144]{0}', space=vmem, size = 0x1800, scoped, tag = 'output window, operand 0, single buffered']
    %10 = vsyncpa [#allocation3], 0
    %11 = vsyncpa [#allocation6], 0
    %12 = vsyncpa [#allocation4], 0
    // Predicated region
    $region2: #{tpu_custom_call.1} parent=1 // pred_check
      _
    $region3: #{tpu_custom_call.1} parent=1 // pred_check_branch
      %14 = sbr.rel (0) target = $region5
    $region4: #{tpu_custom_call.1} parent=1 // pred_region
      %s16 = ssub.s32 64, 64
      %17 = vsyncadd [#allocation3], %s16
      %s19 = sshll.u32 [#allocation2], 4
      %s20 = int_to_ptr.vmem [resolvable:$true] %s19
      %22 = dma.hbm_to_vmem [thread:$0]  %s0, 64, %s20, [#allocation3]
    $region5: #{tpu_custom_call.1} parent=1 // pred_fallthru
      _
    // Predicated region
    $region6: #{tpu_custom_call.1} parent=1 // pred_check
      _
    $region7: #{tpu_custom_call.1} parent=1 // pred_check_branch
      %24 = sbr.rel (0) target = $region9
    $region8: #{tpu_custom_call.1} parent=1 // pred_region
      %s26 = ssub.s32 1024, 1024
      %27 = vsyncadd [#allocation6], %s26
      %s28 = sshll.u32 [#allocation5], 4
      %s29 = int_to_ptr.vmem [resolvable:$true] %s28
      %34 = dma.hbm_to_vmem [thread:$0]  %s1, 1024, %s29, [#allocation6], 256, 256, 16
    $region9: #{tpu_custom_call.1} parent=1 // pred_fallthru
      _
    // Predicated region
    $region10: #{tpu_custom_call.1} parent=1 // pred_check
      _
    $region11: #{tpu_custom_call.1} parent=1 // pred_check_branch
      %36 = sbr.rel (0) target = $region13
    $region12: #{tpu_custom_call.1} parent=1 // pred_region
      _
    $region13: #{tpu_custom_call.1} parent=1 // pred_fallthru
      _
    // Predicated region
    $region14: #{tpu_custom_call.1} parent=1 // pred_check
      _
    $region15: #{tpu_custom_call.1} parent=1 // pred_check_branch
      %38 = sbr.rel (0) target = $region17
    $region16: #{tpu_custom_call.1} parent=1 // pred_region
      %s40 = ssub.s32 9216, 9216
      %41 = vsyncadd [#allocation6], %s40
      %s42 = sshll.u32 [#allocation7], 4
      %s43 = int_to_ptr.vmem [resolvable:$true] %s42
      %48 = dma.hbm_to_vmem [thread:$0]  %s3, 9216, %s43, [#allocation6], 384, 384, 24
    $region17: #{tpu_custom_call.1} parent=1 // pred_fallthru
      _
    // Predicated region
    $region18: #{tpu_custom_call.1} parent=1 // pred_check
      _
    $region19: #{tpu_custom_call.1} parent=1 // pred_check_branch
      %50 = sbr.rel (0) target = $region21
    $region20: #{tpu_custom_call.1} parent=1 // pred_region
      _
    $region21: #{tpu_custom_call.1} parent=1 // pred_fallthru
      _
    // Predicated region
    $region22: #{tpu_custom_call.1} parent=1 // pred_check
      _
    $region23: #{tpu_custom_call.1} parent=1 // pred_check_branch
      %52 = sbr.rel (0) target = $region25
    $region24: #{tpu_custom_call.1} parent=1 // pred_region
      %53 = dma.done [#allocation3], 64
    $region25: #{tpu_custom_call.1} parent=1 // pred_fallthru
      _
    // Predicated region
    $region26: #{tpu_custom_call.1} parent=1 // pred_check
      _
    $region27: #{tpu_custom_call.1} parent=1 // pred_check_branch
      %55 = sbr.rel (0) target = $region29
    $region28: #{tpu_custom_call.1} parent=1 // pred_region
      %56 = dma.done [#allocation6], 1024
    $region29: #{tpu_custom_call.1} parent=1 // pred_fallthru
      _
    // Predicated region
    $region30: #{tpu_custom_call.1} parent=1 // pred_check
      _
    $region31: #{tpu_custom_call.1} parent=1 // pred_check_branch
      %58 = sbr.rel (0) target = $region33
    $region32: #{tpu_custom_call.1} parent=1 // pred_region
      %59 = dma.done [#allocation6], 9216
    $region33: #{tpu_custom_call.1} parent=1 // pred_fallthru
      _
    %v60 = vld [vmem:[#allocation2] sm:$0xf]
    %v61 = vld [vmem:[#allocation5] sm:$0xff]
    %v62 = vld [vmem:[#allocation5 + $0x8] sm:$0xff]
    %v63 = vld [vmem:[#allocation5 + $0x10] sm:$0xff]
    %v64 = vld [vmem:[#allocation5 + $0x18] sm:$0xff]
    %v65 = vld [vmem:[#allocation5 + $0x20] sm:$0xff]
    %v66 = vld [vmem:[#allocation5 + $0x28] sm:$0xff]
    %v67 = vld [vmem:[#allocation5 + $0x30] sm:$0xff]
    %v68 = vld [vmem:[#allocation5 + $0x38] sm:$0xff]
    %v69 = vld [vmem:[%s2] sm:$0x3]
    %v71 = vlaneseq
    %v72 = vshrl.u32 %v71, 7
    %v73 = vsub.s32 0, %v72
    %v74 = vrot.slane %v69, %v73
    %v75 = vlaneseq
    %v76 = vshrl.u32 %v75, 7
    %v77 = vsub.s32 1, %v76
    %v78 = vrot.slane %v69, %v77
    %vm81 = vcmask 261120
    %v83 = vsel %vm81, %v60, 0
    %85 = vmatprep.subr.mxu0 0.0
    %86 = vmatpush1.msra.mxu0 0.0
    %87 = vmatprep.subr.mxu0 0.0
    %88 = vmatpush1.msra.mxu0 0.0
    %89 = vmatprep.subr.mxu0 0.0
    %90 = vmatpush1.msra.mxu0 0.0
    %91 = vmatprep.subr.mxu0 0.0
    %92 = vmatpush1.msra.mxu0 0.0
    %93 = vmatprep.subr.mxu0 0.0
    %94 = vmatpush1.msra.mxu0 0.0
    %95 = vmatprep.subr.mxu0 0.0
    %96 = vmatpush1.msra.mxu0 0.0
    %97 = vmatprep.subr.mxu0 0.0
    %98 = vmatpush1.msra.mxu0 0.0
    %99 = vmatprep.subr.mxu0 0.0
    %100 = vmatpush1.msra.mxu0 0.0
    %101 = vmatprep.subr.mxu0 0.0
    %102 = vmatpush1.msra.mxu0 0.0
    %103 = vmatprep.subr.mxu0 0.0
    %104 = vmatpush1.msra.mxu0 0.0
    %105 = vmatprep.subr.mxu0 0.0
    %106 = vmatpush1.msra.mxu0 0.0
    %107 = vmatprep.subr.mxu0 0.0
    %108 = vmatpush1.msra.mxu0 0.0
    %109 = vmatprep.subr.mxu0 %v68
    %110 = vmatpush1.msra.mxu0 %v67
    %111 = vmatprep.subr.mxu0 %v66
    %112 = vmatpush1.msra.mxu0 %v65
    %113 = vmatprep.subr.mxu0 %v64
    %114 = vmatpush1.msra.mxu0 %v63
    %115 = vmatprep.subr.mxu0 %v62
    %116 = vmatpush1.msra.mxu0 %v61
    %117 = vmatprep.subr.mxu0 0.0
    %118 = vmatpush2.msra.mxu0 0.0
    %119 = vmatprep.subr.mxu0 0.0
    %120 = vmatpush2.msra.mxu0 0.0
    %121 = vmatprep.subr.mxu0 0.0
    %122 = vmatpush2.msra.mxu0 0.0
    %123 = vmatprep.subr.mxu0 0.0
    %124 = vmatpush2.msra.mxu0 0.0
    %125 = vmatprep.subr.mxu0 0.0
    %126 = vmatpush2.msra.mxu0 0.0
    %127 = vmatprep.subr.mxu0 0.0
    %128 = vmatpush2.msra.mxu0 0.0
    %129 = vmatprep.subr.mxu0 0.0
    %130 = vmatpush2.msra.mxu0 0.0
    %131 = vmatprep.subr.mxu0 0.0
    %132 = vmatpush2.msra.mxu0 0.0
    %133 = vmatprep.subr.mxu0 0.0
    %134 = vmatpush2.msra.mxu0 0.0
    %135 = vmatprep.subr.mxu0 0.0
    %136 = vmatpush2.msra.mxu0 0.0
    %137 = vmatprep.subr.mxu0 0.0
    %138 = vmatpush2.msra.mxu0 0.0
    %139 = vmatprep.subr.mxu0 0.0
    %140 = vmatpush2.msra.mxu0 0.0
    %141 = vmatprep.subr.mxu0 0.0
    %142 = vmatpush2.msra.mxu0 0.0
    %143 = vmatprep.subr.mxu0 0.0
    %144 = vmatpush2.msra.mxu0 0.0
    %145 = vmatprep.subr.mxu0 0.0
    %146 = vmatpush2.msra.mxu0 0.0
    %147 = vmatprep.subr.mxu0 0.0
    %148 = vmatpush2.msra.mxu0 0.0
    %149 = vmatprep.mubr.f32.mxu0 0.0
    %150 = vmatmul.mubr.f32.gmra.mxu0 %v83
    %v151 = vpop.f32.mrf.mxu0
    %v152 = vadd.f32 %v74, %v151
    %v153 = vpop.f32.mrf.mxu0
    %v154 = vadd.f32 %v78, %v153
    %155 = vdwg.mxu0
    %v156 = vmax.f32 %v152, 0.0
    %v157 = vmax.f32 %v154, 0.0
    %v158 = vld [vmem:[#allocation7] sm:$0xff]
    %v159 = vld [vmem:[#allocation7 + $0x8] sm:$0xff]
    %v160 = vld [vmem:[#allocation7 + $0x10] sm:$0xff]
    %v161 = vld [vmem:[#allocation7 + $0x18] sm:$0xff]
    %v162 = vld [vmem:[#allocation7 + $0x20] sm:$0xff]
    %v163 = vld [vmem:[#allocation7 + $0x28] sm:$0xff]
    %v164 = vld [vmem:[#allocation7 + $0x30] sm:$0xff]
    %v165 = vld [vmem:[#allocation7 + $0x38] sm:$0xff]
    %v166 = vld [vmem:[#allocation7 + $0x40] sm:$0xff]
    %v167 = vld [vmem:[#allocation7 + $0x48] sm:$0xff]
    %v168 = vld [vmem:[#allocation7 + $0x50] sm:$0xff]
    %v169 = vld [vmem:[#allocation7 + $0x58] sm:$0xff]
    %v170 = vld [vmem:[#allocation7 + $0x60] sm:$0xff]
    %v171 = vld [vmem:[#allocation7 + $0x68] sm:$0xff]
    %v172 = vld [vmem:[#allocation7 + $0x70] sm:$0xff]
    %v173 = vld [vmem:[#allocation7 + $0x78] sm:$0xff]
    %v174 = vld [vmem:[#allocation7 + $0x80] sm:$0xff]
    %v175 = vld [vmem:[#allocation7 + $0x88] sm:$0xff]
    %v176 = vld [vmem:[#allocation7 + $0x90] sm:$0xff]
    %v177 = vld [vmem:[#allocation7 + $0x98] sm:$0xff]
    %v178 = vld [vmem:[#allocation7 + $0xa0] sm:$0xff]
    %v179 = vld [vmem:[#allocation7 + $0xa8] sm:$0xff]
    %v180 = vld [vmem:[#allocation7 + $0xb0] sm:$0xff]
    %v181 = vld [vmem:[#allocation7 + $0xb8] sm:$0xff]
    %v182 = vld [vmem:[#allocation7 + $0xc0] sm:$0xff]
    %v183 = vld [vmem:[#allocation7 + $0xc8] sm:$0xff]
    %v184 = vld [vmem:[#allocation7 + $0xd0] sm:$0xff]
    %v185 = vld [vmem:[#allocation7 + $0xd8] sm:$0xff]
    %v186 = vld [vmem:[#allocation7 + $0xe0] sm:$0xff]
    %v187 = vld [vmem:[#allocation7 + $0xe8] sm:$0xff]
    %v188 = vld [vmem:[#allocation7 + $0xf0] sm:$0xff]
    %v189 = vld [vmem:[#allocation7 + $0xf8] sm:$0xff]
    %v190 = vld [vmem:[#allocation7 + $0x100] sm:$0xff]
    %v191 = vld [vmem:[#allocation7 + $0x108] sm:$0xff]
    %v192 = vld [vmem:[#allocation7 + $0x110] sm:$0xff]
    %v193 = vld [vmem:[#allocation7 + $0x118] sm:$0xff]
    %v194 = vld [vmem:[#allocation7 + $0x120] sm:$0xff]
    %v195 = vld [vmem:[#allocation7 + $0x128] sm:$0xff]
    %v196 = vld [vmem:[#allocation7 + $0x130] sm:$0xff]
    %v197 = vld [vmem:[#allocation7 + $0x138] sm:$0xff]
    %v198 = vld [vmem:[#allocation7 + $0x140] sm:$0xff]
    %v199 = vld [vmem:[#allocation7 + $0x148] sm:$0xff]
    %v200 = vld [vmem:[#allocation7 + $0x150] sm:$0xff]
    %v201 = vld [vmem:[#allocation7 + $0x158] sm:$0xff]
    %v202 = vld [vmem:[#allocation7 + $0x160] sm:$0xff]
    %v203 = vld [vmem:[#allocation7 + $0x168] sm:$0xff]
    %v204 = vld [vmem:[#allocation7 + $0x170] sm:$0xff]
    %v205 = vld [vmem:[#allocation7 + $0x178] sm:$0xff]
    %v206 = vld [vmem:[#allocation7 + $0x180] sm:$0xff]
    %v207 = vld [vmem:[#allocation7 + $0x188] sm:$0xff]
    %v208 = vld [vmem:[#allocation7 + $0x190] sm:$0xff]
    %v209 = vld [vmem:[#allocation7 + $0x198] sm:$0xff]
    %v210 = vld [vmem:[#allocation7 + $0x1a0] sm:$0xff]
    %v211 = vld [vmem:[#allocation7 + $0x1a8] sm:$0xff]
    %v212 = vld [vmem:[#allocation7 + $0x1b0] sm:$0xff]
    %v213 = vld [vmem:[#allocation7 + $0x1b8] sm:$0xff]
    %v214 = vld [vmem:[#allocation7 + $0x1c0] sm:$0xff]
    %v215 = vld [vmem:[#allocation7 + $0x1c8] sm:$0xff]
    %v216 = vld [vmem:[#allocation7 + $0x1d0] sm:$0xff]
    %v217 = vld [vmem:[#allocation7 + $0x1d8] sm:$0xff]
    %v218 = vld [vmem:[#allocation7 + $0x1e0] sm:$0xff]
    %v219 = vld [vmem:[#allocation7 + $0x1e8] sm:$0xff]
    %v220 = vld [vmem:[#allocation7 + $0x1f0] sm:$0xff]
    %v221 = vld [vmem:[#allocation7 + $0x1f8] sm:$0xff]
    %v222 = vld [vmem:[#allocation7 + $0x200] sm:$0xff]
    %v223 = vld [vmem:[#allocation7 + $0x208] sm:$0xff]
    %v224 = vld [vmem:[#allocation7 + $0x210] sm:$0xff]
    %v225 = vld [vmem:[#allocation7 + $0x218] sm:$0xff]
    %v226 = vld [vmem:[#allocation7 + $0x220] sm:$0xff]
    %v227 = vld [vmem:[#allocation7 + $0x228] sm:$0xff]
    %v228 = vld [vmem:[#allocation7 + $0x230] sm:$0xff]
    %v229 = vld [vmem:[#allocation7 + $0x238] sm:$0xff]
    %v230 = vld [vmem:[%s4] sm:$0x7]
    %v232 = vlaneseq
    %v233 = vshrl.u32 %v232, 7
    %v234 = vsub.s32 0, %v233
    %v235 = vrot.slane %v230, %v234
    %v236 = vlaneseq
    %v237 = vshrl.u32 %v236, 7
    %v238 = vsub.s32 1, %v237
    %v239 = vrot.slane %v230, %v238
    %v240 = vlaneseq
    %v241 = vshrl.u32 %v240, 7
    %v242 = vsub.s32 2, %v241
    %v243 = vrot.slane %v230, %v242
    %vm247 = vcmask 523264
    %v249 = vsel %vm247, %v157, 0
    %251 = vmatprep.subr.mxu0 %v204
    %252 = vmatpush1.msra.mxu0 %v203
    %253 = vmatprep.subr.mxu0 %v201
    %254 = vmatpush1.msra.mxu0 %v200
    %255 = vmatprep.subr.mxu0 %v198
    %256 = vmatpush1.msra.mxu0 %v197
    %257 = vmatprep.subr.mxu0 %v195
    %258 = vmatpush1.msra.mxu0 %v194
    %259 = vmatprep.subr.mxu0 %v192
    %260 = vmatpush1.msra.mxu0 %v191
    %261 = vmatprep.subr.mxu0 %v189
    %262 = vmatpush1.msra.mxu0 %v188
    %263 = vmatprep.subr.mxu0 %v186
    %264 = vmatpush1.msra.mxu0 %v185
    %265 = vmatprep.subr.mxu0 %v183
    %266 = vmatpush1.msra.mxu0 %v182
    %267 = vmatprep.subr.mxu0 %v180
    %268 = vmatpush1.msra.mxu0 %v179
    %269 = vmatprep.subr.mxu0 %v177
    %270 = vmatpush1.msra.mxu0 %v176
    %271 = vmatprep.subr.mxu0 %v174
    %272 = vmatpush1.msra.mxu0 %v173
    %273 = vmatprep.subr.mxu0 %v171
    %274 = vmatpush1.msra.mxu0 %v170
    %275 = vmatprep.subr.mxu0 %v168
    %276 = vmatpush1.msra.mxu0 %v167
    %277 = vmatprep.subr.mxu0 %v165
    %278 = vmatpush1.msra.mxu0 %v164
    %279 = vmatprep.subr.mxu0 %v162
    %280 = vmatpush1.msra.mxu0 %v161
    %281 = vmatprep.subr.mxu0 %v159
    %282 = vmatpush1.msra.mxu0 %v158
    %283 = vmatprep.subr.mxu0 0.0
    %284 = vmatpush2.msra.mxu0 0.0
    %285 = vmatprep.subr.mxu0 0.0
    %286 = vmatpush2.msra.mxu0 0.0
    %287 = vmatprep.subr.mxu0 0.0
    %288 = vmatpush2.msra.mxu0 0.0
    %289 = vmatprep.subr.mxu0 0.0
    %290 = vmatpush2.msra.mxu0 0.0
    %291 = vmatprep.subr.mxu0 0.0
    %292 = vmatpush2.msra.mxu0 0.0
    %293 = vmatprep.subr.mxu0 0.0
    %294 = vmatpush2.msra.mxu0 0.0
    %295 = vmatprep.subr.mxu0 0.0
    %296 = vmatpush2.msra.mxu0 0.0
    %297 = vmatprep.subr.mxu0 0.0
    %298 = vmatpush2.msra.mxu0 0.0
    %299 = vmatprep.subr.mxu0 %v228
    %300 = vmatpush2.msra.mxu0 %v227
    %301 = vmatprep.subr.mxu0 %v225
    %302 = vmatpush2.msra.mxu0 %v224
    %303 = vmatprep.subr.mxu0 %v222
    %304 = vmatpush2.msra.mxu0 %v221
    %305 = vmatprep.subr.mxu0 %v219
    %306 = vmatpush2.msra.mxu0 %v218
    %307 = vmatprep.subr.mxu0 %v216
    %308 = vmatpush2.msra.mxu0 %v215
    %309 = vmatprep.subr.mxu0 %v213
    %310 = vmatpush2.msra.mxu0 %v212
    %311 = vmatprep.subr.mxu0 %v210
    %312 = vmatpush2.msra.mxu0 %v209
    %313 = vmatprep.subr.mxu0 %v207
    %314 = vmatpush2.msra.mxu0 %v206
    %315 = vmatprep.mubr.f32.mxu0 %v249
    %316 = vmatmul.mubr.f32.gmra.mxu0 %v156
    %v317 = vpop.f32.mrf.mxu0
    %v318 = vadd.f32 %v235, %v317
    %v319 = vpop.f32.mrf.mxu0
    %v320 = vadd.f32 %v239, %v319
    %321 = vdwg.mxu0
    %322 = vmatprep.subr.mxu0 0.0
    %323 = vmatpush1.msra.mxu0 %v205
    %324 = vmatprep.subr.mxu0 0.0
    %325 = vmatpush1.msra.mxu0 %v202
    %326 = vmatprep.subr.mxu0 0.0
    %327 = vmatpush1.msra.mxu0 %v199
    %328 = vmatprep.subr.mxu0 0.0
    %329 = vmatpush1.msra.mxu0 %v196
    %330 = vmatprep.subr.mxu0 0.0
    %331 = vmatpush1.msra.mxu0 %v193
    %332 = vmatprep.subr.mxu0 0.0
    %333 = vmatpush1.msra.mxu0 %v190
    %334 = vmatprep.subr.mxu0 0.0
    %335 = vmatpush1.msra.mxu0 %v187
    %336 = vmatprep.subr.mxu0 0.0
    %337 = vmatpush1.msra.mxu0 %v184
    %338 = vmatprep.subr.mxu0 0.0
    %339 = vmatpush1.msra.mxu0 %v181
    %340 = vmatprep.subr.mxu0 0.0
    %341 = vmatpush1.msra.mxu0 %v178
    %342 = vmatprep.subr.mxu0 0.0
    %343 = vmatpush1.msra.mxu0 %v175
    %344 = vmatprep.subr.mxu0 0.0
    %345 = vmatpush1.msra.mxu0 %v172
    %346 = vmatprep.subr.mxu0 0.0
    %347 = vmatpush1.msra.mxu0 %v169
    %348 = vmatprep.subr.mxu0 0.0
    %349 = vmatpush1.msra.mxu0 %v166
    %350 = vmatprep.subr.mxu0 0.0
    %351 = vmatpush1.msra.mxu0 %v163
    %352 = vmatprep.subr.mxu0 0.0
    %353 = vmatpush1.msra.mxu0 %v160
    %354 = vmatprep.subr.mxu0 0.0
    %355 = vmatpush2.msra.mxu0 0.0
    %356 = vmatprep.subr.mxu0 0.0
    %357 = vmatpush2.msra.mxu0 0.0
    %358 = vmatprep.subr.mxu0 0.0
    %359 = vmatpush2.msra.mxu0 0.0
    %360 = vmatprep.subr.mxu0 0.0
    %361 = vmatpush2.msra.mxu0 0.0
    %362 = vmatprep.subr.mxu0 0.0
    %363 = vmatpush2.msra.mxu0 0.0
    %364 = vmatprep.subr.mxu0 0.0
    %365 = vmatpush2.msra.mxu0 0.0
    %366 = vmatprep.subr.mxu0 0.0
    %367 = vmatpush2.msra.mxu0 0.0
    %368 = vmatprep.subr.mxu0 0.0
    %369 = vmatpush2.msra.mxu0 0.0
    %370 = vmatprep.subr.mxu0 0.0
    %371 = vmatpush2.msra.mxu0 %v229
    %372 = vmatprep.subr.mxu0 0.0
    %373 = vmatpush2.msra.mxu0 %v226
    %374 = vmatprep.subr.mxu0 0.0
    %375 = vmatpush2.msra.mxu0 %v223
    %376 = vmatprep.subr.mxu0 0.0
    %377 = vmatpush2.msra.mxu0 %v220
    %378 = vmatprep.subr.mxu0 0.0
    %379 = vmatpush2.msra.mxu0 %v217
    %380 = vmatprep.subr.mxu0 0.0
    %381 = vmatpush2.msra.mxu0 %v214
    %382 = vmatprep.subr.mxu0 0.0
    %383 = vmatpush2.msra.mxu0 %v211
    %384 = vmatprep.subr.mxu0 0.0
    %385 = vmatpush2.msra.mxu0 %v208
    %386 = vmatprep.mubr.f32.mxu0 %v249
    %387 = vmatmul.mubr.f32.gmra.mxu0 %v156
    %v388 = vpop.f32.mrf.mxu0
    %v389 = vadd.f32 %v243, %v388
    %v390 = vpop.f32.mrf.mxu0
    %391 = vdwg.mxu0
    %vm392 = vcmask 1043456
    %v393 = vsel %vm392, %v318, 0.0
    %394 = vadd.xlane.f32.xlu0 %v393
    %v395 = vpop.xlane.xlu0 %394
    %v396 = vsub.f32 %v395, %v318
    %v397 = vmul.f32 %v396, 0.5
    %399 = vset.pattern.permute.xlu0 127
    %400 = vperm.xlu0 %399, %v397
    %v401 = vpop.permute.xlu0 %400
    %v403 = vsub.f32 %v318, %v401
    %405 = vset.pattern.permute.xlu0 127
    %406 = vperm.xlu0 %405, %v318
    %v407 = vpop.permute.xlu0 %406
    %v409 = vadd.f32 %v403, %v407
    %v410 = vsel %vm392, %v320, 0.0
    %411 = vadd.xlane.f32.xlu0 %v410
    %v412 = vpop.xlane.xlu0 %411
    %v413 = vsub.f32 %v412, %v320
    %v414 = vmul.f32 %v413, 0.33333334
    %416 = vset.pattern.permute.xlu0 127
    %417 = vperm.xlu0 %416, %v414
    %v418 = vpop.permute.xlu0 %417
    %v420 = vsub.f32 %v320, %v418
    %422 = vset.pattern.permute.xlu0 127
    %423 = vperm.xlu0 %422, %v320
    %v424 = vpop.permute.xlu0 %423
    %v426 = vadd.f32 %v420, %v424
    %v427 = vsel %vm392, %v389, 0.0
    %428 = vadd.xlane.f32.xlu0 %v427
    %v429 = vpop.xlane.xlu0 %428
    %v430 = vsub.f32 %v429, %v389
    %v431 = vmul.f32 %v430, 0.2
    %433 = vset.pattern.permute.xlu0 127
    %434 = vperm.xlu0 %433, %v431
    %v435 = vpop.permute.xlu0 %434
    %v437 = vsub.f32 %v389, %v435
    %439 = vset.pattern.permute.xlu0 127
    %440 = vperm.xlu0 %439, %v389
    %v441 = vpop.permute.xlu0 %440
    %v443 = vadd.f32 %v437, %v441
    %v446 = vcombine.low %v409, %v426
    %448 = vst [vmem:[#allocation8] sm:$0xff] %v446
    %449 = vst [vmem:[#allocation8 + $0x8] sm:$0xf] %v443
    // Predicated region
    $region34: #{tpu_custom_call.1} parent=1 // pred_check
      _
    $region35: #{tpu_custom_call.1} parent=1 // pred_check_branch
      %451 = sbr.rel (0) target = $region37
    $region36: #{tpu_custom_call.1} parent=1 // pred_region
      %s453 = ssub.s32 192, 192
      %454 = vsyncadd [#allocation4], %s453
      %s456 = sshll.u32 [#allocation8], 4
      %s457 = int_to_ptr.vmem [resolvable:$true] %s456
      %459 = dma.vmem_to_hbm [thread:$0]  %s457, 192, %s5, [#allocation4]
    $region37: #{tpu_custom_call.1} parent=1 // pred_fallthru
      _
    // Predicated region
    $region38: #{tpu_custom_call.1} parent=1 // pred_check
      _
    $region39: #{tpu_custom_call.1} parent=1 // pred_check_branch
      %461 = sbr.rel (0) target = $region41
    $region40: #{tpu_custom_call.1} parent=1 // pred_region
      %462 = dma.done [#allocation4], 192
    $region41: #{tpu_custom_call.1} parent=1 // pred_fallthru
      _
    %463 = vsyncpa [#allocation3], 1
    %464 = vsyncpa [#allocation6], 1
    %465 = vsyncpa [#allocation4], 1

</llo_original>
